<compile_context>
chip_gen: v7x
topology: tpu7x:2x2x1
jax: 0.10.0
libtpu: 0.0.40
codegen_flags: <defaults>
</compile_context>

<pallas_src>
import jax
import jax.numpy as jnp
from jax.experimental import pallas as pl
from jax.experimental.pallas import tpu as pltpu


_LANES = 128
_MAX_BLOCK_BYTES = 2 * 1024 * 1024  # 2 MiB per buffer: safe on v5e/v6e/v7x


def _copy_kernel(x_ref, o_ref):
    # Identity data path: the abstract Encoder defines no transformation.
    o_ref[...] = x_ref[...]


def _pick_tile_rows(n_rows, row_bytes):
    """Largest row-tile that (a) divides n_rows, (b) stays under the VMEM
    byte cap, and (c) respects the (8, 128) sublane tiling when it is a
    proper sub-block (a full-extent block is always legal)."""
    max_rows = max(1, _MAX_BLOCK_BYTES // row_bytes)
    if n_rows <= max_rows:
        return n_rows  # one (or few) full-extent blocks
    # Prefer a divisor of n_rows that is a multiple of 8 and <= max_rows.
    start = int(max_rows) - (int(max_rows) % 8)
    for d in range(start, 0, -8):
        if d > 0 and n_rows % d == 0:
            return d
    # Fallback: any divisor (full-extent semantics not guaranteed; rare).
    for d in range(int(min(n_rows, max_rows)), 0, -1):
        if n_rows % d == 0:
            return d
    return n_rows


def encoder_forward(X, *args):
    """Pallas-backed forward matching the abstract Encoder.forward(X, *args)
    signature.  Returns X passed through an identity Pallas data path."""
    total = X.size
    nbytes = total * X.dtype.itemsize
    cost = pl.CostEstimate(flops=0, transcendentals=0, bytes_accessed=2 * nbytes)

    if total % _LANES == 0:
        # Lane-dense 2D slab: last dim is exactly 128 lanes -> unmasked vst.
        n_rows = total // _LANES
        x2d = X.reshape(n_rows, _LANES)
        row_bytes = _LANES * X.dtype.itemsize
        tile_rows = _pick_tile_rows(n_rows, row_bytes)
        grid = (n_rows // tile_rows,)

        out2d = pl.pallas_call(
            _copy_kernel,
            out_shape=jax.ShapeDtypeStruct((n_rows, _LANES), X.dtype),
            grid=grid,
            in_specs=[pl.BlockSpec((tile_rows, _LANES), lambda i: (i, 0))],
            out_specs=pl.BlockSpec((tile_rows, _LANES), lambda i: (i, 0)),
            input_output_aliases={0: 0},
            cost_estimate=cost,
            compiler_params=pltpu.CompilerParams(
                dimension_semantics=("parallel",)
            ),
        )(x2d)
        return out2d.reshape(X.shape)

    # Fallback: total not a multiple of 128 lanes -> single full-extent block
    # (full array dims in the last two positions keep the tiling legal).
    # TODO(synk): pad-to-128 path not needed for the standard (B, S, H) demo.
    B = X.shape[0]
    rest = X.shape[1:]
    out = pl.pallas_call(
        _copy_kernel,
        out_shape=jax.ShapeDtypeStruct(X.shape, X.dtype),
        grid=(1,),
        in_specs=[pl.BlockSpec((B,) + rest, lambda i: (0,) * X.ndim)],
        out_specs=pl.BlockSpec((B,) + rest, lambda i: (0,) * X.ndim),
        input_output_aliases={0: 0},
        cost_estimate=cost,
        compiler_params=pltpu.CompilerParams(
            dimension_semantics=("arbitrary",)
        ),
    )(X)
    return out


if __name__ == "__main__":
    key = jax.random.PRNGKey(0)

    batch, seq, hidden = 2, 8, 32
    X = jax.random.normal(key, (batch, seq, hidden), dtype=jnp.float32)

    out = encoder_forward(X)
    out = jax.block_until_ready(out)

    # Sanity: identity data path must hold exactly.
    assert out.shape == X.shape
    assert jnp.allclose(out, X)

    print("KERNEL_OK")
</pallas_src>

<mosaic_0001>
module attributes {stable_mosaic.version = 11 : i64} {
  func.func @_copy_kernel(%arg0: i32, %arg1: memref<4x128xf32, #tpu.memory_space<vmem>>, %arg2: memref<4x128xf32, #tpu.memory_space<vmem>>) attributes {dimension_semantics = [#tpu.dimension_semantics<parallel>], iteration_bounds = array<i64: 1>, scalar_prefetch = 0 : i64, scratch_operands = 0 : i64, tpu.core_type = #tpu.core_type<tc>, window_params = [{transform_indices = @transform_0, window_bounds = array<i64: 4, 128>}, {transform_indices = @transform_1, window_bounds = array<i64: 4, 128>}]} {
    %c0 = arith.constant 0 : index
    %c0_0 = arith.constant 0 : index
    %0 = vector.load %arg1[%c0, %c0_0] : memref<4x128xf32, #tpu.memory_space<vmem>>, vector<4x128xf32>
    %c0_1 = arith.constant 0 : index
    %c0_2 = arith.constant 0 : index
    %1 = vector.load %arg2[%c0_1, %c0_2] : memref<4x128xf32, #tpu.memory_space<vmem>>, vector<4x128xf32>
    tpu.vector_store %arg2[%c0_1, %c0_2], %0 {strides = array<i32>} : memref<4x128xf32, #tpu.memory_space<vmem>>, vector<4x128xf32>,
    return
  }
  func.func @transform_0(%arg0: i32) -> (i32, i32) {
    %c0_i32 = arith.constant 0 : i32
    %c0_i32_0 = arith.constant 0 : i32
    return %arg0, %c0_i32 : i32, i32
  }
  func.func @transform_1(%arg0: i32) -> (i32, i32) {
    %c0_i32 = arith.constant 0 : i32
    %c0_i32_0 = arith.constant 0 : i32
    return %arg0, %c0_i32 : i32, i32
  }
}

</mosaic_0001>

<llo_original>
// kernel: tpu_custom_call.1
$region0: #{tpu_custom_call.1}
  #allocation0 [shape = 'u32[]', space=smem, size = 0x4, offset = 0x4, fixed_abs, tag = 'smem constant byte address 0x4 - core index']
  #allocation1 [shape = 'u32[144,128]{1,0:T(1,128)}', space=vmem, size = 0x12000, scoped, tag = 'internal scratch']
  %s0 = inlined_call_operand.hbm [shape: f32[4,128], index: 0, kind: input, shape index: {}, may-alias: {0,1}]
  %s1 = inlined_call_operand.hbm [shape: f32[4,128], index: 1, kind: output, shape index: {}, may-alias: {0,1}]
  %s2 = sld [smem:[#allocation0]]
  $region18: #{tpu_custom_call.1} parent=0
    _
  %s4 = ssub.s32 1, %s2
  %s5 = scalar_select 0, %s4, %s2
  $region1: #{tpu_custom_call.1} parent=0
    #allocation2 [shape = 'u8[2048]{0}', space=vmem, size = 0x800, scoped, tag = 'input window, operand 0, single buffered']
    #allocation3 [shape = 's32[1]{0}', space=sflag, size = 0x4, scoped, tag = 'scoped memory for tpu_custom_call.1']
    #allocation4 [shape = 's32[1]{0}', space=sflag, size = 0x4, scoped, tag = 'scoped memory for tpu_custom_call.1']
    #allocation5 [shape = 'u8[2048]{0}', space=vmem, size = 0x800, scoped, tag = 'output window, operand 0, single buffered']
    %6 = vsyncpa [#allocation3], 0
    %7 = vsyncpa [#allocation4], 0
    // Predicated region
    $region2: #{tpu_custom_call.1} parent=1 // pred_check
      _
    $region3: #{tpu_custom_call.1} parent=1 // pred_check_branch
      %9 = sbr.rel (0) target = $region5
    $region4: #{tpu_custom_call.1} parent=1 // pred_region
      %s11 = ssub.s32 64, 64
      %12 = vsyncadd [#allocation3], %s11
      %s14 = sshll.u32 [#allocation2], 4
      %s15 = int_to_ptr.vmem [resolvable:$true] %s14
      %17 = dma.hbm_to_vmem [thread:$0]  %s0, 64, %s15, [#allocation3]
    $region5: #{tpu_custom_call.1} parent=1 // pred_fallthru
      _
    // Predicated region
    $region6: #{tpu_custom_call.1} parent=1 // pred_check
      _
    $region7: #{tpu_custom_call.1} parent=1 // pred_check_branch
      %19 = sbr.rel (0) target = $region9
    $region8: #{tpu_custom_call.1} parent=1 // pred_region
      %20 = dma.done [#allocation3], 64
    $region9: #{tpu_custom_call.1} parent=1 // pred_fallthru
      _
    %v21 = vld [vmem:[#allocation2] sm:$0xf]
    %22 = vst [vmem:[#allocation5] sm:$0xf] %v21
    // Predicated region
    $region10: #{tpu_custom_call.1} parent=1 // pred_check
      _
    $region11: #{tpu_custom_call.1} parent=1 // pred_check_branch
      %24 = sbr.rel (0) target = $region13
    $region12: #{tpu_custom_call.1} parent=1 // pred_region
      %s26 = ssub.s32 64, 64
      %27 = vsyncadd [#allocation4], %s26
      %s29 = sshll.u32 [#allocation5], 4
      %s30 = int_to_ptr.vmem [resolvable:$true] %s29
      %32 = dma.vmem_to_hbm [thread:$0]  %s30, 64, %s1, [#allocation4]
    $region13: #{tpu_custom_call.1} parent=1 // pred_fallthru
      _
    // Predicated region
    $region14: #{tpu_custom_call.1} parent=1 // pred_check
      _
    $region15: #{tpu_custom_call.1} parent=1 // pred_check_branch
      %34 = sbr.rel (0) target = $region17
    $region16: #{tpu_custom_call.1} parent=1 // pred_region
      %35 = dma.done [#allocation4], 64
    $region17: #{tpu_custom_call.1} parent=1 // pred_fallthru
      _
    %36 = vsyncpa [#allocation3], 1
    %37 = vsyncpa [#allocation4], 1

</llo_original>
